<compile_context>
chip_gen: v7x
topology: tpu7x:2x2x1
jax: 0.10.0
libtpu: 0.0.40
codegen_flags: <defaults>
</compile_context>

<pallas_src>
import functools
import math

import jax
import jax.numpy as jnp
from jax.experimental import pallas as pl
from jax.experimental.pallas import tpu as pltpu


def gaussian_taps_1d(kernel_size, sigma):
    """Normalized 1D Gaussian taps as compile-time Python floats.

    The reference module's 2D kernel equals outer(taps, taps) exactly: the
    un-normalized 2D kernel is a product of per-axis Gaussians and the
    normalization constant factorizes."""
    K = int(kernel_size)
    sigma = float(sigma)
    mean = (K - 1) / 2.0
    g = [math.exp(-(((i - mean) / sigma) ** 2) / 2.0) for i in range(K)]
    s = sum(g)
    return tuple(v / s for v in g)


def make_gaussian_weight(channels, kernel_size, sigma, dim=2, dtype=jnp.float32):
    """Reproduces GaussianSmoothing.__init__ buffer construction: (C, K, K).
    Used only for the reference check in __main__."""
    if isinstance(kernel_size, (int, float)):
        kernel_size = [int(kernel_size)] * dim
    if isinstance(sigma, (int, float)):
        sigma = [float(sigma)] * dim
    grids = jnp.meshgrid(
        *[jnp.arange(s, dtype=jnp.float32) for s in kernel_size], indexing="ij"
    )
    kernel = jnp.ones((), jnp.float32)
    for size, std, mgrid in zip(kernel_size, sigma, grids):
        mean = (size - 1) / 2.0
        kernel = kernel * (
            1.0 / (std * math.sqrt(2.0 * math.pi))
            * jnp.exp(-(((mgrid - mean) / std) ** 2) / 2.0)
        )
    kernel = kernel / jnp.sum(kernel)
    kernel = jnp.broadcast_to(kernel[None, ...], (channels, *kernel.shape))
    return kernel.astype(dtype)


def _gaussian_sep_kernel(x_ref, o_ref, *, taps, K, H_out, W_out):
    # x_ref: (B, C, H, W) in VMEM ; o_ref: (B, C, H_out, W_out).
    # Single full-block load; all shifted windows below are static slices of
    # this register-resident value (XLU shifts), not repeated VMEM loads.
    x = x_ref[...].astype(jnp.float32)

    # Horizontal 1D pass (lane axis): h[..., j] = sum_dj taps[dj] * x[..., j+dj]
    # Initialize with the first tap's product (saves one full add pass).
    h = taps[0] * x[:, :, :, 0:W_out]
    for dj in range(1, K):
        h = h + taps[dj] * x[:, :, :, dj:dj + W_out]

    # Vertical 1D pass (sublane axis): v[.., i, :] = sum_di taps[di] * h[.., i+di, :]
    v = taps[0] * h[:, :, 0:H_out, :]
    for di in range(1, K):
        v = v + taps[di] * h[:, :, di:di + H_out, :]

    o_ref[...] = v.astype(o_ref.dtype)


def _default_batch_blocks(n):
    """2-way batch split on dual-TensorCore chips (v7x/v4/v5p) so both cores
    get work; a single grid step on 1-TC chips (v5e/v6e) to minimize per-step
    overhead on this tiny, overhead-dominated problem."""
    try:
        kind = jax.devices()[0].device_kind.lower()
    except Exception:
        kind = ""
    dual_tc = any(t in kind for t in ("v7", "v4", "v5p"))
    return 2 if (dual_tc and n >= 2 and n % 2 == 0) else 1


def gaussian_smoothing(x, kernel_size, sigma, *, batch_blocks=None):
    """Depthwise 'valid' Gaussian smoothing, x: (N, C, H, W).

    Semantics match GaussianSmoothing.forward (F.conv2d, groups=C, no padding):
    the same Gaussian kernel (built from kernel_size/sigma) is applied to every
    channel independently.  Returns (N, C, H-K+1, W-K+1)."""
    N, C, H, W = x.shape
    K = int(kernel_size)
    assert H >= K and W >= K, "spatial dims must be >= kernel_size for valid conv"
    H_out, W_out = H - K + 1, W - K + 1

    # Compile-time taps (VLIW immediates in the kernel).
    taps = gaussian_taps_1d(K, sigma)

    if batch_blocks is None:
        batch_blocks = _default_batch_blocks(N)
    assert N % batch_blocks == 0
    B = N // batch_blocks

    kernel = functools.partial(
        _gaussian_sep_kernel, taps=taps, K=K, H_out=H_out, W_out=W_out
    )

    # Blocks span the full (C, H, W) extents, so the (8,128) constraint is
    # satisfied via the "equal to full array dims" rule.
    # TODO(synk): for large real images, add halo H-tiling + 128-lane W-tiling
    # (lane-dense stores) with tiles sized for v7x's 64 MiB VMEM.
    return pl.pallas_call(
        kernel,
        out_shape=jax.ShapeDtypeStruct((N, C, H_out, W_out), x.dtype),
        grid_spec=pltpu.PrefetchScalarGridSpec(
            num_scalar_prefetch=0,
            grid=(batch_blocks,),
            in_specs=[pl.BlockSpec((B, C, H, W), lambda n: (n, 0, 0, 0))],
            out_specs=pl.BlockSpec((B, C, H_out, W_out), lambda n: (n, 0, 0, 0)),
        ),
        compiler_params=pltpu.CompilerParams(
            dimension_semantics=("parallel",)
        ),
    )(x)


if __name__ == "__main__":
    # Module config (deterministic, synthetic): channels=4, kernel_size=5, sigma=1, dim=2
    channels, kernel_size, sigma = 4, 5, 1.0
    N, H, W = 2, 16, 16

    key = jax.random.PRNGKey(0)
    x = jax.random.uniform(key, (N, channels, H, W), dtype=jnp.float32)

    out = gaussian_smoothing(x, kernel_size, sigma)
    out = jax.block_until_ready(out)

    # Reference: the module's (C, K, K) buffer + XLA depthwise valid conv,
    # identical semantics to F.conv2d(x, weight.view(C,1,K,K), groups=C).
    weight = make_gaussian_weight(channels, kernel_size, sigma, dim=2)

    # Sanity: the 2D buffer is exactly the outer product of the 1D taps
    # (the separable rewrite used by the kernel is exact).
    taps = jnp.asarray(gaussian_taps_1d(kernel_size, sigma), jnp.float32)
    assert jnp.allclose(weight[0], jnp.outer(taps, taps), atol=1e-6)

    ref = jax.lax.conv_general_dilated(
        x,
        weight[:, None, :, :],  # (C, 1, K, K) OIHW with feature_group_count=C
        window_strides=(1, 1),
        padding="VALID",
        dimension_numbers=("NCHW", "OIHW", "NCHW"),
        feature_group_count=channels,
    )
    assert out.shape == (N, channels, H - kernel_size + 1, W - kernel_size + 1)
    assert jnp.allclose(out, ref, atol=1e-5, rtol=1e-5)
    print("KERNEL_OK")
</pallas_src>

<mosaic_0001>
module attributes {stable_mosaic.version = 11 : i64} {
  func.func @_gaussian_sep_kernel(%arg0: i32, %arg1: memref<2x4x16x16xf32, #tpu.memory_space<vmem>>, %arg2: memref<2x4x12x12xf32, #tpu.memory_space<vmem>>) attributes {dimension_semantics = [#tpu.dimension_semantics<parallel>], iteration_bounds = array<i64: 1>, scalar_prefetch = 0 : i64, scratch_operands = 0 : i64, tpu.core_type = #tpu.core_type<tc>, window_params = [{transform_indices = @transform_0, window_bounds = array<i64: 2, 4, 16, 16>}, {transform_indices = @transform_1, window_bounds = array<i64: 2, 4, 12, 12>}]} {
    %c0 = arith.constant 0 : index
    %c0_0 = arith.constant 0 : index
    %c0_1 = arith.constant 0 : index
    %c0_2 = arith.constant 0 : index
    %0 = vector.load %arg1[%c0, %c0_0, %c0_1, %c0_2] : memref<2x4x16x16xf32, #tpu.memory_space<vmem>>, vector<2x4x16x16xf32>
    %1 = vector.extract_strided_slice %0 {offsets = [0, 0, 0, 0], sizes = [2, 4, 16, 12], strides = [1, 1, 1, 1]} : vector<2x4x16x16xf32> to vector<2x4x16x12xf32>
    %cst = arith.constant 0.054488685 : f32
    %2 = vector.broadcast %cst : f32 to vector<2x4x16x12xf32>
    %3 = arith.mulf %2, %1 : vector<2x4x16x12xf32>
    %4 = vector.extract_strided_slice %0 {offsets = [0, 0, 0, 1], sizes = [2, 4, 16, 12], strides = [1, 1, 1, 1]} : vector<2x4x16x16xf32> to vector<2x4x16x12xf32>
    %cst_3 = arith.constant 0.244201347 : f32
    %5 = vector.broadcast %cst_3 : f32 to vector<2x4x16x12xf32>
    %6 = arith.mulf %5, %4 : vector<2x4x16x12xf32>
    %7 = arith.addf %3, %6 : vector<2x4x16x12xf32>
    %8 = vector.extract_strided_slice %0 {offsets = [0, 0, 0, 2], sizes = [2, 4, 16, 12], strides = [1, 1, 1, 1]} : vector<2x4x16x16xf32> to vector<2x4x16x12xf32>
    %cst_4 = arith.constant 0.402619958 : f32
    %9 = vector.broadcast %cst_4 : f32 to vector<2x4x16x12xf32>
    %10 = arith.mulf %9, %8 : vector<2x4x16x12xf32>
    %11 = arith.addf %7, %10 : vector<2x4x16x12xf32>
    %12 = vector.extract_strided_slice %0 {offsets = [0, 0, 0, 3], sizes = [2, 4, 16, 12], strides = [1, 1, 1, 1]} : vector<2x4x16x16xf32> to vector<2x4x16x12xf32>
    %cst_5 = arith.constant 0.244201347 : f32
    %13 = vector.broadcast %cst_5 : f32 to vector<2x4x16x12xf32>
    %14 = arith.mulf %13, %12 : vector<2x4x16x12xf32>
    %15 = arith.addf %11, %14 : vector<2x4x16x12xf32>
    %16 = vector.extract_strided_slice %0 {offsets = [0, 0, 0, 4], sizes = [2, 4, 16, 12], strides = [1, 1, 1, 1]} : vector<2x4x16x16xf32> to vector<2x4x16x12xf32>
    %cst_6 = arith.constant 0.054488685 : f32
    %17 = vector.broadcast %cst_6 : f32 to vector<2x4x16x12xf32>
    %18 = arith.mulf %17, %16 : vector<2x4x16x12xf32>
    %19 = arith.addf %15, %18 : vector<2x4x16x12xf32>
    %20 = vector.extract_strided_slice %19 {offsets = [0, 0, 0, 0], sizes = [2, 4, 12, 12], strides = [1, 1, 1, 1]} : vector<2x4x16x12xf32> to vector<2x4x12x12xf32>
    %cst_7 = arith.constant 0.054488685 : f32
    %21 = vector.broadcast %cst_7 : f32 to vector<2x4x12x12xf32>
    %22 = arith.mulf %21, %20 : vector<2x4x12x12xf32>
    %23 = vector.extract_strided_slice %19 {offsets = [0, 0, 1, 0], sizes = [2, 4, 12, 12], strides = [1, 1, 1, 1]} : vector<2x4x16x12xf32> to vector<2x4x12x12xf32>
    %cst_8 = arith.constant 0.244201347 : f32
    %24 = vector.broadcast %cst_8 : f32 to vector<2x4x12x12xf32>
    %25 = arith.mulf %24, %23 : vector<2x4x12x12xf32>
    %26 = arith.addf %22, %25 : vector<2x4x12x12xf32>
    %27 = vector.extract_strided_slice %19 {offsets = [0, 0, 2, 0], sizes = [2, 4, 12, 12], strides = [1, 1, 1, 1]} : vector<2x4x16x12xf32> to vector<2x4x12x12xf32>
    %cst_9 = arith.constant 0.402619958 : f32
    %28 = vector.broadcast %cst_9 : f32 to vector<2x4x12x12xf32>
    %29 = arith.mulf %28, %27 : vector<2x4x12x12xf32>
    %30 = arith.addf %26, %29 : vector<2x4x12x12xf32>
    %31 = vector.extract_strided_slice %19 {offsets = [0, 0, 3, 0], sizes = [2, 4, 12, 12], strides = [1, 1, 1, 1]} : vector<2x4x16x12xf32> to vector<2x4x12x12xf32>
    %cst_10 = arith.constant 0.244201347 : f32
    %32 = vector.broadcast %cst_10 : f32 to vector<2x4x12x12xf32>
    %33 = arith.mulf %32, %31 : vector<2x4x12x12xf32>
    %34 = arith.addf %30, %33 : vector<2x4x12x12xf32>
    %35 = vector.extract_strided_slice %19 {offsets = [0, 0, 4, 0], sizes = [2, 4, 12, 12], strides = [1, 1, 1, 1]} : vector<2x4x16x12xf32> to vector<2x4x12x12xf32>
    %cst_11 = arith.constant 0.054488685 : f32
    %36 = vector.broadcast %cst_11 : f32 to vector<2x4x12x12xf32>
    %37 = arith.mulf %36, %35 : vector<2x4x12x12xf32>
    %38 = arith.addf %34, %37 : vector<2x4x12x12xf32>
    %c0_12 = arith.constant 0 : index
    %c0_13 = arith.constant 0 : index
    %c0_14 = arith.constant 0 : index
    %c0_15 = arith.constant 0 : index
    %39 = vector.load %arg2[%c0_12, %c0_13, %c0_14, %c0_15] : memref<2x4x12x12xf32, #tpu.memory_space<vmem>>, vector<2x4x12x12xf32>
    tpu.vector_store %arg2[%c0_12, %c0_13, %c0_14, %c0_15], %38 {strides = array<i32>} : memref<2x4x12x12xf32, #tpu.memory_space<vmem>>, vector<2x4x12x12xf32>,
    return
  }
  func.func @transform_0(%arg0: i32) -> (i32, i32, i32, i32) {
    %c0_i32 = arith.constant 0 : i32
    %c0_i32_0 = arith.constant 0 : i32
    %c0_i32_1 = arith.constant 0 : i32
    %c0_i32_2 = arith.constant 0 : i32
    return %arg0, %c0_i32, %c0_i32_0, %c0_i32_1 : i32, i32, i32, i32
  }
  func.func @transform_1(%arg0: i32) -> (i32, i32, i32, i32) {
    %c0_i32 = arith.constant 0 : i32
    %c0_i32_0 = arith.constant 0 : i32
    %c0_i32_1 = arith.constant 0 : i32
    %c0_i32_2 = arith.constant 0 : i32
    return %arg0, %c0_i32, %c0_i32_0, %c0_i32_1 : i32, i32, i32, i32
  }
}

</mosaic_0001>

<llo_original>
// kernel: tpu_custom_call.1
$region0: #{tpu_custom_call.1}
  #allocation0 [shape = 'u32[]', space=smem, size = 0x4, offset = 0x4, fixed_abs, tag = 'smem constant byte address 0x4 - core index']
  #allocation1 [shape = 'u32[144,128]{1,0:T(1,128)}', space=vmem, size = 0x12000, scoped, tag = 'internal scratch']
  %s0 = inlined_call_operand.hbm [shape: f32[2,4,16,16], index: 0, kind: input, shape index: {}]
  %s1 = inlined_call_operand.vmem [shape: f32[2,4,12,12], index: 1, kind: output, shape index: {}]
  %s2 = sld [smem:[#allocation0]]
  $region18: #{tpu_custom_call.1} parent=0
    _
  %s4 = ssub.s32 1, %s2
  %s5 = scalar_select 0, %s4, %s2
  $region1: #{tpu_custom_call.1} parent=0
    #allocation2 [shape = 'u8[65536]{0}', space=vmem, size = 0x10000, scoped, tag = 'input window, operand 0, single buffered']
    #allocation3 [shape = 's32[1]{0}', space=sflag, size = 0x4, scoped, tag = 'scoped memory for tpu_custom_call.1']
    %6 = vsyncpa [#allocation3], 0
    // Predicated region
    $region2: #{tpu_custom_call.1} parent=1 // pred_check
      _
    $region3: #{tpu_custom_call.1} parent=1 // pred_check_branch
      %8 = sbr.rel (0) target = $region5
    $region4: #{tpu_custom_call.1} parent=1 // pred_region
      %s10 = ssub.s32 2048, 2048
      %11 = vsyncadd [#allocation3], %s10
      %s12 = sshll.u32 [#allocation2], 4
      %s13 = int_to_ptr.vmem [resolvable:$true] %s12
      %18 = dma.hbm_to_vmem [thread:$0]  %s0, 2048, %s13, [#allocation3], 128, 128, 8
    $region5: #{tpu_custom_call.1} parent=1 // pred_fallthru
      _
    // Predicated region
    $region6: #{tpu_custom_call.1} parent=1 // pred_check
      _
    $region7: #{tpu_custom_call.1} parent=1 // pred_check_branch
      %20 = sbr.rel (0) target = $region9
    $region8: #{tpu_custom_call.1} parent=1 // pred_region
      %21 = dma.done [#allocation3], 2048
    $region9: #{tpu_custom_call.1} parent=1 // pred_fallthru
      _
    %v22 = vld [vmem:[#allocation2] sm:$0xff]
    %v23 = vld [vmem:[#allocation2 + $0x8] sm:$0xff]
    %v24 = vld [vmem:[#allocation2 + $0x10] sm:$0xff]
    %v25 = vld [vmem:[#allocation2 + $0x18] sm:$0xff]
    %v26 = vld [vmem:[#allocation2 + $0x20] sm:$0xff]
    %v27 = vld [vmem:[#allocation2 + $0x28] sm:$0xff]
    %v28 = vld [vmem:[#allocation2 + $0x30] sm:$0xff]
    %v29 = vld [vmem:[#allocation2 + $0x38] sm:$0xff]
    %v30 = vld [vmem:[#allocation2 + $0x40] sm:$0xff]
    %v31 = vld [vmem:[#allocation2 + $0x48] sm:$0xff]
    %v32 = vld [vmem:[#allocation2 + $0x50] sm:$0xff]
    %v33 = vld [vmem:[#allocation2 + $0x58] sm:$0xff]
    %v34 = vld [vmem:[#allocation2 + $0x60] sm:$0xff]
    %v35 = vld [vmem:[#allocation2 + $0x68] sm:$0xff]
    %v36 = vld [vmem:[#allocation2 + $0x70] sm:$0xff]
    %v37 = vld [vmem:[#allocation2 + $0x78] sm:$0xff]
    %v38 = vmul.f32 %v22, 0.054488685
    %v39 = vmul.f32 %v23, 0.054488685
    %v40 = vmul.f32 %v24, 0.054488685
    %v41 = vmul.f32 %v25, 0.054488685
    %v42 = vmul.f32 %v26, 0.054488685
    %v43 = vmul.f32 %v27, 0.054488685
    %v44 = vmul.f32 %v28, 0.054488685
    %v45 = vmul.f32 %v29, 0.054488685
    %v46 = vmul.f32 %v30, 0.054488685
    %v47 = vmul.f32 %v31, 0.054488685
    %v48 = vmul.f32 %v32, 0.054488685
    %v49 = vmul.f32 %v33, 0.054488685
    %v50 = vmul.f32 %v34, 0.054488685
    %v51 = vmul.f32 %v35, 0.054488685
    %v52 = vmul.f32 %v36, 0.054488685
    %v53 = vmul.f32 %v37, 0.054488685
    %v54 = vmul.f32 %v22, 0.24420135
    %v55 = vmul.f32 %v23, 0.24420135
    %v56 = vmul.f32 %v24, 0.24420135
    %v57 = vmul.f32 %v25, 0.24420135
    %v58 = vmul.f32 %v26, 0.24420135
    %v59 = vmul.f32 %v27, 0.24420135
    %v60 = vmul.f32 %v28, 0.24420135
    %v61 = vmul.f32 %v29, 0.24420135
    %v62 = vmul.f32 %v30, 0.24420135
    %v63 = vmul.f32 %v31, 0.24420135
    %v64 = vmul.f32 %v32, 0.24420135
    %v65 = vmul.f32 %v33, 0.24420135
    %v66 = vmul.f32 %v34, 0.24420135
    %v67 = vmul.f32 %v35, 0.24420135
    %v68 = vmul.f32 %v36, 0.24420135
    %v69 = vmul.f32 %v37, 0.24420135
    %86 = vrot.lane.b32.xlu0 %v54, 127
    %v87 = vpop.permute.xlu0 %86
    %88 = vrot.lane.b32.xlu0 %v55, 127
    %v89 = vpop.permute.xlu0 %88
    %90 = vrot.lane.b32.xlu0 %v56, 127
    %v91 = vpop.permute.xlu0 %90
    %92 = vrot.lane.b32.xlu0 %v57, 127
    %v93 = vpop.permute.xlu0 %92
    %94 = vrot.lane.b32.xlu0 %v58, 127
    %v95 = vpop.permute.xlu0 %94
    %96 = vrot.lane.b32.xlu0 %v59, 127
    %v97 = vpop.permute.xlu0 %96
    %98 = vrot.lane.b32.xlu0 %v60, 127
    %v99 = vpop.permute.xlu0 %98
    %100 = vrot.lane.b32.xlu0 %v61, 127
    %v101 = vpop.permute.xlu0 %100
    %102 = vrot.lane.b32.xlu0 %v62, 127
    %v103 = vpop.permute.xlu0 %102
    %104 = vrot.lane.b32.xlu0 %v63, 127
    %v105 = vpop.permute.xlu0 %104
    %106 = vrot.lane.b32.xlu0 %v64, 127
    %v107 = vpop.permute.xlu0 %106
    %108 = vrot.lane.b32.xlu0 %v65, 127
    %v109 = vpop.permute.xlu0 %108
    %110 = vrot.lane.b32.xlu0 %v66, 127
    %v111 = vpop.permute.xlu0 %110
    %112 = vrot.lane.b32.xlu0 %v67, 127
    %v113 = vpop.permute.xlu0 %112
    %114 = vrot.lane.b32.xlu0 %v68, 127
    %v115 = vpop.permute.xlu0 %114
    %116 = vrot.lane.b32.xlu0 %v69, 127
    %v117 = vpop.permute.xlu0 %116
    %v134 = vadd.f32 %v38, %v87
    %v135 = vadd.f32 %v39, %v89
    %v136 = vadd.f32 %v40, %v91
    %v137 = vadd.f32 %v41, %v93
    %v138 = vadd.f32 %v42, %v95
    %v139 = vadd.f32 %v43, %v97
    %v140 = vadd.f32 %v44, %v99
    %v141 = vadd.f32 %v45, %v101
    %v142 = vadd.f32 %v46, %v103
    %v143 = vadd.f32 %v47, %v105
    %v144 = vadd.f32 %v48, %v107
    %v145 = vadd.f32 %v49, %v109
    %v146 = vadd.f32 %v50, %v111
    %v147 = vadd.f32 %v51, %v113
    %v148 = vadd.f32 %v52, %v115
    %v149 = vadd.f32 %v53, %v117
    %v150 = vmul.f32 %v22, 0.40261996
    %v151 = vmul.f32 %v23, 0.40261996
    %v152 = vmul.f32 %v24, 0.40261996
    %v153 = vmul.f32 %v25, 0.40261996
    %v154 = vmul.f32 %v26, 0.40261996
    %v155 = vmul.f32 %v27, 0.40261996
    %v156 = vmul.f32 %v28, 0.40261996
    %v157 = vmul.f32 %v29, 0.40261996
    %v158 = vmul.f32 %v30, 0.40261996
    %v159 = vmul.f32 %v31, 0.40261996
    %v160 = vmul.f32 %v32, 0.40261996
    %v161 = vmul.f32 %v33, 0.40261996
    %v162 = vmul.f32 %v34, 0.40261996
    %v163 = vmul.f32 %v35, 0.40261996
    %v164 = vmul.f32 %v36, 0.40261996
    %v165 = vmul.f32 %v37, 0.40261996
    %182 = vrot.lane.b32.xlu0 %v150, 126
    %v183 = vpop.permute.xlu0 %182
    %184 = vrot.lane.b32.xlu0 %v151, 126
    %v185 = vpop.permute.xlu0 %184
    %186 = vrot.lane.b32.xlu0 %v152, 126
    %v187 = vpop.permute.xlu0 %186
    %188 = vrot.lane.b32.xlu0 %v153, 126
    %v189 = vpop.permute.xlu0 %188
    %190 = vrot.lane.b32.xlu0 %v154, 126
    %v191 = vpop.permute.xlu0 %190
    %192 = vrot.lane.b32.xlu0 %v155, 126
    %v193 = vpop.permute.xlu0 %192
    %194 = vrot.lane.b32.xlu0 %v156, 126
    %v195 = vpop.permute.xlu0 %194
    %196 = vrot.lane.b32.xlu0 %v157, 126
    %v197 = vpop.permute.xlu0 %196
    %198 = vrot.lane.b32.xlu0 %v158, 126
    %v199 = vpop.permute.xlu0 %198
    %200 = vrot.lane.b32.xlu0 %v159, 126
    %v201 = vpop.permute.xlu0 %200
    %202 = vrot.lane.b32.xlu0 %v160, 126
    %v203 = vpop.permute.xlu0 %202
    %204 = vrot.lane.b32.xlu0 %v161, 126
    %v205 = vpop.permute.xlu0 %204
    %206 = vrot.lane.b32.xlu0 %v162, 126
    %v207 = vpop.permute.xlu0 %206
    %208 = vrot.lane.b32.xlu0 %v163, 126
    %v209 = vpop.permute.xlu0 %208
    %210 = vrot.lane.b32.xlu0 %v164, 126
    %v211 = vpop.permute.xlu0 %210
    %212 = vrot.lane.b32.xlu0 %v165, 126
    %v213 = vpop.permute.xlu0 %212
    %v230 = vadd.f32 %v134, %v183
    %v231 = vadd.f32 %v135, %v185
    %v232 = vadd.f32 %v136, %v187
    %v233 = vadd.f32 %v137, %v189
    %v234 = vadd.f32 %v138, %v191
    %v235 = vadd.f32 %v139, %v193
    %v236 = vadd.f32 %v140, %v195
    %v237 = vadd.f32 %v141, %v197
    %v238 = vadd.f32 %v142, %v199
    %v239 = vadd.f32 %v143, %v201
    %v240 = vadd.f32 %v144, %v203
    %v241 = vadd.f32 %v145, %v205
    %v242 = vadd.f32 %v146, %v207
    %v243 = vadd.f32 %v147, %v209
    %v244 = vadd.f32 %v148, %v211
    %v245 = vadd.f32 %v149, %v213
    %246 = vrot.lane.b32.xlu0 %v54, 125
    %v247 = vpop.permute.xlu0 %246
    %248 = vrot.lane.b32.xlu0 %v55, 125
    %v249 = vpop.permute.xlu0 %248
    %250 = vrot.lane.b32.xlu0 %v56, 125
    %v251 = vpop.permute.xlu0 %250
    %252 = vrot.lane.b32.xlu0 %v57, 125
    %v253 = vpop.permute.xlu0 %252
    %254 = vrot.lane.b32.xlu0 %v58, 125
    %v255 = vpop.permute.xlu0 %254
    %256 = vrot.lane.b32.xlu0 %v59, 125
    %v257 = vpop.permute.xlu0 %256
    %258 = vrot.lane.b32.xlu0 %v60, 125
    %v259 = vpop.permute.xlu0 %258
    %260 = vrot.lane.b32.xlu0 %v61, 125
    %v261 = vpop.permute.xlu0 %260
    %262 = vrot.lane.b32.xlu0 %v62, 125
    %v263 = vpop.permute.xlu0 %262
    %264 = vrot.lane.b32.xlu0 %v63, 125
    %v265 = vpop.permute.xlu0 %264
    %266 = vrot.lane.b32.xlu0 %v64, 125
    %v267 = vpop.permute.xlu0 %266
    %268 = vrot.lane.b32.xlu0 %v65, 125
    %v269 = vpop.permute.xlu0 %268
    %270 = vrot.lane.b32.xlu0 %v66, 125
    %v271 = vpop.permute.xlu0 %270
    %272 = vrot.lane.b32.xlu0 %v67, 125
    %v273 = vpop.permute.xlu0 %272
    %274 = vrot.lane.b32.xlu0 %v68, 125
    %v275 = vpop.permute.xlu0 %274
    %276 = vrot.lane.b32.xlu0 %v69, 125
    %v277 = vpop.permute.xlu0 %276
    %v294 = vadd.f32 %v230, %v247
    %v295 = vadd.f32 %v231, %v249
    %v296 = vadd.f32 %v232, %v251
    %v297 = vadd.f32 %v233, %v253
    %v298 = vadd.f32 %v234, %v255
    %v299 = vadd.f32 %v235, %v257
    %v300 = vadd.f32 %v236, %v259
    %v301 = vadd.f32 %v237, %v261
    %v302 = vadd.f32 %v238, %v263
    %v303 = vadd.f32 %v239, %v265
    %v304 = vadd.f32 %v240, %v267
    %v305 = vadd.f32 %v241, %v269
    %v306 = vadd.f32 %v242, %v271
    %v307 = vadd.f32 %v243, %v273
    %v308 = vadd.f32 %v244, %v275
    %v309 = vadd.f32 %v245, %v277
    %326 = vrot.lane.b32.xlu0 %v38, 124
    %v327 = vpop.permute.xlu0 %326
    %328 = vrot.lane.b32.xlu0 %v39, 124
    %v329 = vpop.permute.xlu0 %328
    %330 = vrot.lane.b32.xlu0 %v40, 124
    %v331 = vpop.permute.xlu0 %330
    %332 = vrot.lane.b32.xlu0 %v41, 124
    %v333 = vpop.permute.xlu0 %332
    %334 = vrot.lane.b32.xlu0 %v42, 124
    %v335 = vpop.permute.xlu0 %334
    %336 = vrot.lane.b32.xlu0 %v43, 124
    %v337 = vpop.permute.xlu0 %336
    %338 = vrot.lane.b32.xlu0 %v44, 124
    %v339 = vpop.permute.xlu0 %338
    %340 = vrot.lane.b32.xlu0 %v45, 124
    %v341 = vpop.permute.xlu0 %340
    %342 = vrot.lane.b32.xlu0 %v46, 124
    %v343 = vpop.permute.xlu0 %342
    %344 = vrot.lane.b32.xlu0 %v47, 124
    %v345 = vpop.permute.xlu0 %344
    %346 = vrot.lane.b32.xlu0 %v48, 124
    %v347 = vpop.permute.xlu0 %346
    %348 = vrot.lane.b32.xlu0 %v49, 124
    %v349 = vpop.permute.xlu0 %348
    %350 = vrot.lane.b32.xlu0 %v50, 124
    %v351 = vpop.permute.xlu0 %350
    %352 = vrot.lane.b32.xlu0 %v51, 124
    %v353 = vpop.permute.xlu0 %352
    %354 = vrot.lane.b32.xlu0 %v52, 124
    %v355 = vpop.permute.xlu0 %354
    %356 = vrot.lane.b32.xlu0 %v53, 124
    %v357 = vpop.permute.xlu0 %356
    %v374 = vadd.f32 %v294, %v327
    %v375 = vadd.f32 %v295, %v329
    %v376 = vadd.f32 %v296, %v331
    %v377 = vadd.f32 %v297, %v333
    %v378 = vadd.f32 %v298, %v335
    %v379 = vadd.f32 %v299, %v337
    %v380 = vadd.f32 %v300, %v339
    %v381 = vadd.f32 %v301, %v341
    %v382 = vadd.f32 %v302, %v343
    %v383 = vadd.f32 %v303, %v345
    %v384 = vadd.f32 %v304, %v347
    %v385 = vadd.f32 %v305, %v349
    %v386 = vadd.f32 %v306, %v351
    %v387 = vadd.f32 %v307, %v353
    %v388 = vadd.f32 %v308, %v355
    %v389 = vadd.f32 %v309, %v357
    %v390 = vmul.f32 %v374, 0.054488685
    %v391 = vmul.f32 %v375, 0.054488685
    %v392 = vmul.f32 %v376, 0.054488685
    %v393 = vmul.f32 %v377, 0.054488685
    %v394 = vmul.f32 %v378, 0.054488685
    %v395 = vmul.f32 %v379, 0.054488685
    %v396 = vmul.f32 %v380, 0.054488685
    %v397 = vmul.f32 %v381, 0.054488685
    %v398 = vmul.f32 %v382, 0.054488685
    %v399 = vmul.f32 %v383, 0.054488685
    %v400 = vmul.f32 %v384, 0.054488685
    %v401 = vmul.f32 %v385, 0.054488685
    %v402 = vmul.f32 %v386, 0.054488685
    %v403 = vmul.f32 %v387, 0.054488685
    %v404 = vmul.f32 %v388, 0.054488685
    %v405 = vmul.f32 %v389, 0.054488685
    %v406 = vmul.f32 %v374, 0.24420135
    %v407 = vmul.f32 %v375, 0.24420135
    %v408 = vmul.f32 %v376, 0.24420135
    %v409 = vmul.f32 %v377, 0.24420135
    %v410 = vmul.f32 %v378, 0.24420135
    %v411 = vmul.f32 %v379, 0.24420135
    %v412 = vmul.f32 %v380, 0.24420135
    %v413 = vmul.f32 %v381, 0.24420135
    %v414 = vmul.f32 %v382, 0.24420135
    %v415 = vmul.f32 %v383, 0.24420135
    %v416 = vmul.f32 %v384, 0.24420135
    %v417 = vmul.f32 %v385, 0.24420135
    %v418 = vmul.f32 %v386, 0.24420135
    %v419 = vmul.f32 %v387, 0.24420135
    %v420 = vmul.f32 %v388, 0.24420135
    %v421 = vmul.f32 %v389, 0.24420135
    %vm438 = vcmask 1046528
    %v439 = vrot.slane %v406, 1
    %v440 = vrot.slane %v407, 1
    %v441 = vsel %vm438, %v439, %v440
    %v442 = vrot.slane %v408, 1
    %v443 = vrot.slane %v409, 1
    %v444 = vsel %vm438, %v442, %v443
    %v445 = vrot.slane %v410, 1
    %v446 = vrot.slane %v411, 1
    %v447 = vsel %vm438, %v445, %v446
    %v448 = vrot.slane %v412, 1
    %v449 = vrot.slane %v413, 1
    %v450 = vsel %vm438, %v448, %v449
    %v451 = vrot.slane %v414, 1
    %v452 = vrot.slane %v415, 1
    %v453 = vsel %vm438, %v451, %v452
    %v454 = vrot.slane %v416, 1
    %v455 = vrot.slane %v417, 1
    %v456 = vsel %vm438, %v454, %v455
    %v457 = vrot.slane %v418, 1
    %v458 = vrot.slane %v419, 1
    %v459 = vsel %vm438, %v457, %v458
    %v460 = vrot.slane %v420, 1
    %v461 = vrot.slane %v421, 1
    %v462 = vsel %vm438, %v460, %v461
    %v479 = vadd.f32 %v390, %v441
    %v480 = vadd.f32 %v391, %v440
    %v481 = vadd.f32 %v392, %v444
    %v482 = vadd.f32 %v393, %v443
    %v483 = vadd.f32 %v394, %v447
    %v484 = vadd.f32 %v395, %v446
    %v485 = vadd.f32 %v396, %v450
    %v486 = vadd.f32 %v397, %v449
    %v487 = vadd.f32 %v398, %v453
    %v488 = vadd.f32 %v399, %v452
    %v489 = vadd.f32 %v400, %v456
    %v490 = vadd.f32 %v401, %v455
    %v491 = vadd.f32 %v402, %v459
    %v492 = vadd.f32 %v403, %v458
    %v493 = vadd.f32 %v404, %v462
    %v494 = vadd.f32 %v405, %v461
    %v495 = vmul.f32 %v374, 0.40261996
    %v496 = vmul.f32 %v375, 0.40261996
    %v497 = vmul.f32 %v376, 0.40261996
    %v498 = vmul.f32 %v377, 0.40261996
    %v499 = vmul.f32 %v378, 0.40261996
    %v500 = vmul.f32 %v379, 0.40261996
    %v501 = vmul.f32 %v380, 0.40261996
    %v502 = vmul.f32 %v381, 0.40261996
    %v503 = vmul.f32 %v382, 0.40261996
    %v504 = vmul.f32 %v383, 0.40261996
    %v505 = vmul.f32 %v384, 0.40261996
    %v506 = vmul.f32 %v385, 0.40261996
    %v507 = vmul.f32 %v386, 0.40261996
    %v508 = vmul.f32 %v387, 0.40261996
    %v509 = vmul.f32 %v388, 0.40261996
    %v510 = vmul.f32 %v389, 0.40261996
    %vm527 = vcmask 1045504
    %v528 = vrot.slane %v495, 2
    %v529 = vrot.slane %v496, 2
    %v530 = vsel %vm527, %v528, %v529
    %v531 = vrot.slane %v497, 2
    %v532 = vrot.slane %v498, 2
    %v533 = vsel %vm527, %v531, %v532
    %v534 = vrot.slane %v499, 2
    %v535 = vrot.slane %v500, 2
    %v536 = vsel %vm527, %v534, %v535
    %v537 = vrot.slane %v501, 2
    %v538 = vrot.slane %v502, 2
    %v539 = vsel %vm527, %v537, %v538
    %v540 = vrot.slane %v503, 2
    %v541 = vrot.slane %v504, 2
    %v542 = vsel %vm527, %v540, %v541
    %v543 = vrot.slane %v505, 2
    %v544 = vrot.slane %v506, 2
    %v545 = vsel %vm527, %v543, %v544
    %v546 = vrot.slane %v507, 2
    %v547 = vrot.slane %v508, 2
    %v548 = vsel %vm527, %v546, %v547
    %v549 = vrot.slane %v509, 2
    %v550 = vrot.slane %v510, 2
    %v551 = vsel %vm527, %v549, %v550
    %v568 = vadd.f32 %v479, %v530
    %v569 = vadd.f32 %v480, %v529
    %v570 = vadd.f32 %v481, %v533
    %v571 = vadd.f32 %v482, %v532
    %v572 = vadd.f32 %v483, %v536
    %v573 = vadd.f32 %v484, %v535
    %v574 = vadd.f32 %v485, %v539
    %v575 = vadd.f32 %v486, %v538
    %v576 = vadd.f32 %v487, %v542
    %v577 = vadd.f32 %v488, %v541
    %v578 = vadd.f32 %v489, %v545
    %v579 = vadd.f32 %v490, %v544
    %v580 = vadd.f32 %v491, %v548
    %v581 = vadd.f32 %v492, %v547
    %v582 = vadd.f32 %v493, %v551
    %v583 = vadd.f32 %v494, %v550
    %vm584 = vcmask 1044480
    %v585 = vrot.slane %v406, 3
    %v586 = vrot.slane %v407, 3
    %v587 = vsel %vm584, %v585, %v586
    %v588 = vrot.slane %v408, 3
    %v589 = vrot.slane %v409, 3
    %v590 = vsel %vm584, %v588, %v589
    %v591 = vrot.slane %v410, 3
    %v592 = vrot.slane %v411, 3
    %v593 = vsel %vm584, %v591, %v592
    %v594 = vrot.slane %v412, 3
    %v595 = vrot.slane %v413, 3
    %v596 = vsel %vm584, %v594, %v595
    %v597 = vrot.slane %v414, 3
    %v598 = vrot.slane %v415, 3
    %v599 = vsel %vm584, %v597, %v598
    %v600 = vrot.slane %v416, 3
    %v601 = vrot.slane %v417, 3
    %v602 = vsel %vm584, %v600, %v601
    %v603 = vrot.slane %v418, 3
    %v604 = vrot.slane %v419, 3
    %v605 = vsel %vm584, %v603, %v604
    %v606 = vrot.slane %v420, 3
    %v607 = vrot.slane %v421, 3
    %v608 = vsel %vm584, %v606, %v607
    %v625 = vadd.f32 %v568, %v587
    %v626 = vadd.f32 %v569, %v586
    %v627 = vadd.f32 %v570, %v590
    %v628 = vadd.f32 %v571, %v589
    %v629 = vadd.f32 %v572, %v593
    %v630 = vadd.f32 %v573, %v592
    %v631 = vadd.f32 %v574, %v596
    %v632 = vadd.f32 %v575, %v595
    %v633 = vadd.f32 %v576, %v599
    %v634 = vadd.f32 %v577, %v598
    %v635 = vadd.f32 %v578, %v602
    %v636 = vadd.f32 %v579, %v601
    %v637 = vadd.f32 %v580, %v605
    %v638 = vadd.f32 %v581, %v604
    %v639 = vadd.f32 %v582, %v608
    %v640 = vadd.f32 %v583, %v607
    %vm657 = vcmask 1043456
    %v658 = vrot.slane %v390, 4
    %v659 = vrot.slane %v391, 4
    %v660 = vsel %vm657, %v658, %v659
    %v661 = vrot.slane %v392, 4
    %v662 = vrot.slane %v393, 4
    %v663 = vsel %vm657, %v661, %v662
    %v664 = vrot.slane %v394, 4
    %v665 = vrot.slane %v395, 4
    %v666 = vsel %vm657, %v664, %v665
    %v667 = vrot.slane %v396, 4
    %v668 = vrot.slane %v397, 4
    %v669 = vsel %vm657, %v667, %v668
    %v670 = vrot.slane %v398, 4
    %v671 = vrot.slane %v399, 4
    %v672 = vsel %vm657, %v670, %v671
    %v673 = vrot.slane %v400, 4
    %v674 = vrot.slane %v401, 4
    %v675 = vsel %vm657, %v673, %v674
    %v676 = vrot.slane %v402, 4
    %v677 = vrot.slane %v403, 4
    %v678 = vsel %vm657, %v676, %v677
    %v679 = vrot.slane %v404, 4
    %v680 = vrot.slane %v405, 4
    %v681 = vsel %vm657, %v679, %v680
    %v698 = vadd.f32 %v625, %v660
    %v699 = vadd.f32 %v626, %v659
    %v700 = vadd.f32 %v627, %v663
    %v701 = vadd.f32 %v628, %v662
    %v702 = vadd.f32 %v629, %v666
    %v703 = vadd.f32 %v630, %v665
    %v704 = vadd.f32 %v631, %v669
    %v705 = vadd.f32 %v632, %v668
    %v706 = vadd.f32 %v633, %v672
    %v707 = vadd.f32 %v634, %v671
    %v708 = vadd.f32 %v635, %v675
    %v709 = vadd.f32 %v636, %v674
    %v710 = vadd.f32 %v637, %v678
    %v711 = vadd.f32 %v638, %v677
    %v712 = vadd.f32 %v639, %v681
    %v713 = vadd.f32 %v640, %v680
    %vm714 = vcmask 97280
    %715 = vst.msk [vmem:[%s1] sm:$0xff] %vm714, %v698
    %vm716 = vcmask 93184
    %717 = vst.msk [vmem:[%s1 + $0x8] sm:$0xf] %vm716, %v699
    %718 = vst.msk [vmem:[%s1 + $0x10] sm:$0xff] %vm714, %v700
    %719 = vst.msk [vmem:[%s1 + $0x18] sm:$0xf] %vm716, %v701
    %720 = vst.msk [vmem:[%s1 + $0x20] sm:$0xff] %vm714, %v702
    %721 = vst.msk [vmem:[%s1 + $0x28] sm:$0xf] %vm716, %v703
    %722 = vst.msk [vmem:[%s1 + $0x30] sm:$0xff] %vm714, %v704
    %723 = vst.msk [vmem:[%s1 + $0x38] sm:$0xf] %vm716, %v705
    %724 = vst.msk [vmem:[%s1 + $0x40] sm:$0xff] %vm714, %v706
    %725 = vst.msk [vmem:[%s1 + $0x48] sm:$0xf] %vm716, %v707
    %726 = vst.msk [vmem:[%s1 + $0x50] sm:$0xff] %vm714, %v708
    %727 = vst.msk [vmem:[%s1 + $0x58] sm:$0xf] %vm716, %v709
    %728 = vst.msk [vmem:[%s1 + $0x60] sm:$0xff] %vm714, %v710
    %729 = vst.msk [vmem:[%s1 + $0x68] sm:$0xf] %vm716, %v711
    %730 = vst.msk [vmem:[%s1 + $0x70] sm:$0xff] %vm714, %v712
    %731 = vst.msk [vmem:[%s1 + $0x78] sm:$0xf] %vm716, %v713
    // Predicated region
    $region10: #{tpu_custom_call.1} parent=1 // pred_check
      _
    $region11: #{tpu_custom_call.1} parent=1 // pred_check_branch
      %733 = sbr.rel (0) target = $region13
    $region12: #{tpu_custom_call.1} parent=1 // pred_region
      _
    $region13: #{tpu_custom_call.1} parent=1 // pred_fallthru
      _
    // Predicated region
    $region14: #{tpu_custom_call.1} parent=1 // pred_check
      _
    $region15: #{tpu_custom_call.1} parent=1 // pred_check_branch
      %735 = sbr.rel (0) target = $region17
    $region16: #{tpu_custom_call.1} parent=1 // pred_region
      _
    $region17: #{tpu_custom_call.1} parent=1 // pred_fallthru
      _
    %736 = vsyncpa [#allocation3], 1

</llo_original>
